<compile_context>
chip_gen: v6e
topology: v6e:2x2x1
jax: 0.10.0
libtpu: 0.0.40
codegen_flags: <defaults>
</compile_context>

<pallas_src>
import jax
import jax.numpy as jnp
from jax.experimental import pallas as pl
from jax.experimental.pallas import tpu as pltpu

# ---- module-consistent logical shapes -------------------------------------
B, S_ENC, S_DEC = 2, 8, 8
D_MODEL = 32
HIDDEN = 32
V_SRC, V_TGT = 64, 64

# ---- lane-dense padded shapes (TPU vreg = 8 sublanes x 128 lanes) ----------
LANE = 128
D_PAD = LANE          # D_MODEL -> 128
H_PAD = LANE          # HIDDEN  -> 128
V_PAD = LANE          # V_SRC / V_TGT -> 128

N_ENC = B * S_ENC     # 16 rows (multiple of 8 sublanes)
N_DEC = B * S_DEC     # 16 rows

_NEG_INF = -1e30
_ATTN_SCALE = 1.0 / (HIDDEN ** 0.5)


# ---------------------------------------------------------------------------
# Fused kernel: embed -> encode -> cross-attention decode -> CE loss (scalar)
# Single grid point; batch folded into sublanes; enc_state never leaves VMEM.
# ---------------------------------------------------------------------------
def _fused_enc_dec_loss_kernel(src_tok_ref, tgt_tok_ref, e_src_ref, e_tgt_ref,
                               w_enc_ref, b_enc_ref, w_out_ref, b_out_ref,
                               loss_ref):
    f32 = jnp.float32

    # ---- embedding lookups: one-hot @ table on the MXU (in-kernel gather) ----
    src_tok = src_tok_ref[...]                                        # (N_ENC, 1) i32
    tgt_tok = tgt_tok_ref[...]                                        # (N_DEC, 1) i32
    src_cols = jax.lax.broadcasted_iota(jnp.int32, (N_ENC, V_PAD), 1)
    tgt_cols = jax.lax.broadcasted_iota(jnp.int32, (N_DEC, V_PAD), 1)
    src_onehot = (src_cols == src_tok).astype(f32)                    # (16, 128)
    tgt_onehot = (tgt_cols == tgt_tok).astype(f32)                    # (16, 128)
    src_emb = jnp.dot(src_onehot, e_src_ref[...],
                      preferred_element_type=f32)                     # (16, D_PAD)
    dec_emb = jnp.dot(tgt_onehot, e_tgt_ref[...],
                      preferred_element_type=f32)                     # (16, H_PAD)

    # ---- encoder: enc_state = tanh(src_emb @ W_enc + b_enc) ------------------
    enc = jnp.tanh(
        jnp.dot(src_emb, w_enc_ref[...], preferred_element_type=f32)
        + b_enc_ref[...])                                             # (16, H_PAD)

    # ---- decoder: batched scaled-dot cross attention over encoder states -----
    dec3 = dec_emb.reshape(B, S_DEC, H_PAD)
    enc3 = enc.reshape(B, S_ENC, H_PAD)
    scores = jnp.einsum('bqd,bkd->bqk', dec3, enc3,
                        preferred_element_type=f32)                   # (B, S_DEC, S_ENC)
    scores = scores * _ATTN_SCALE
    m = jnp.max(scores, axis=-1, keepdims=True)
    p = jnp.exp(scores - m)
    attn = p * pl.reciprocal(jnp.sum(p, axis=-1, keepdims=True), approx=True)
    ctx = jnp.einsum('bqk,bkd->bqd', attn, enc3,
                     preferred_element_type=f32)                      # (B, S_DEC, H_PAD)

    h = jnp.tanh(dec3 + ctx).reshape(N_DEC, H_PAD)
    logits = jnp.dot(h, w_out_ref[...],
                     preferred_element_type=f32) + b_out_ref[...]     # (16, V_PAD)

    # mask padded vocab columns out of the softmax
    logits = jnp.where(tgt_cols < V_TGT, logits,
                       jnp.full_like(logits, _NEG_INF))

    # ---- token-level cross-entropy (integer targets; no one-hot input) -------
    lm = jnp.max(logits, axis=-1, keepdims=True)
    lse = lm + jnp.log(jnp.sum(jnp.exp(logits - lm), axis=-1, keepdims=True))
    tgt_logit = jnp.sum(jnp.where(tgt_cols == tgt_tok, logits, 0.0),
                        axis=-1, keepdims=True)
    nll = lse - tgt_logit                                             # (N_DEC, 1)
    # TODO(synk): unmasked mean over B*S_DEC tokens; real decoder masks padding.
    loss_ref[...] = jnp.sum(nll, axis=(0, 1), keepdims=True) * (1.0 / f32(N_DEC))


def fused_loss(params, src_tok2d, tgt_tok2d):
    return pl.pallas_call(
        _fused_enc_dec_loss_kernel,
        out_shape=jax.ShapeDtypeStruct((1, 1), jnp.float32),
        grid=(1,),
        in_specs=[
            pl.BlockSpec((N_ENC, 1), lambda i: (0, 0)),
            pl.BlockSpec((N_DEC, 1), lambda i: (0, 0)),
            pl.BlockSpec((V_PAD, D_PAD), lambda i: (0, 0)),
            pl.BlockSpec((V_PAD, H_PAD), lambda i: (0, 0)),
            pl.BlockSpec((D_PAD, H_PAD), lambda i: (0, 0)),
            pl.BlockSpec((1, H_PAD), lambda i: (0, 0)),
            pl.BlockSpec((H_PAD, V_PAD), lambda i: (0, 0)),
            pl.BlockSpec((1, V_PAD), lambda i: (0, 0)),
        ],
        out_specs=pl.BlockSpec((1, 1), lambda i: (0, 0)),
        compiler_params=pltpu.CompilerParams(
            dimension_semantics=("arbitrary",)),
    )(src_tok2d, tgt_tok2d,
      params["E_src"], params["E_tgt"],
      params["W_enc"], params["b_enc"],
      params["W_out"], params["b_out"])


# ---------------------------------------------------------------------------
# Encoder-only kernel (used only for the infer branch, which needs enc_state).
# ---------------------------------------------------------------------------
def _encode_kernel(src_tok_ref, e_src_ref, w_enc_ref, b_enc_ref, enc_ref):
    f32 = jnp.float32
    cols = jax.lax.broadcasted_iota(jnp.int32, (N_ENC, V_PAD), 1)
    onehot = (cols == src_tok_ref[...]).astype(f32)
    src_emb = jnp.dot(onehot, e_src_ref[...], preferred_element_type=f32)
    enc_ref[...] = jnp.tanh(
        jnp.dot(src_emb, w_enc_ref[...], preferred_element_type=f32)
        + b_enc_ref[...])


def encode(params, src_tok2d):
    enc = pl.pallas_call(
        _encode_kernel,
        out_shape=jax.ShapeDtypeStruct((N_ENC, H_PAD), jnp.float32),
        grid=(1,),
        in_specs=[
            pl.BlockSpec((N_ENC, 1), lambda i: (0, 0)),
            pl.BlockSpec((V_PAD, D_PAD), lambda i: (0, 0)),
            pl.BlockSpec((D_PAD, H_PAD), lambda i: (0, 0)),
            pl.BlockSpec((1, H_PAD), lambda i: (0, 0)),
        ],
        out_specs=pl.BlockSpec((N_ENC, H_PAD), lambda i: (0, 0)),
    )(src_tok2d, params["E_src"], params["W_enc"], params["b_enc"])
    return enc[:, :HIDDEN].reshape(B, S_ENC, HIDDEN)


# ---------------------------------------------------------------------------
# BatchedEncDecModel.forward(input_batch, compute_loss=True, infer=False)
# ---------------------------------------------------------------------------
def batched_enc_dec_forward(params, src_tokens, tgt_tokens,
                            compute_loss=True, infer=False):
    ret_dic = {}
    src2 = src_tokens.reshape(N_ENC, 1).astype(jnp.int32)
    tgt2 = tgt_tokens.reshape(N_DEC, 1).astype(jnp.int32)
    if compute_loss:
        loss = fused_loss(params, src2, tgt2)
        # TODO(synk): enc_state.enc_loss aux-loss branch — synthetic encoder has none.
        ret_dic["loss"] = loss[0, 0]
    if infer:
        # TODO(synk): begin_batched_inference (beam search) has no clean Pallas
        # equivalent; expose the batched encoder state instead.
        ret_dic["enc_state"] = encode(params, src2)
    return ret_dic


# ---------------------------------------------------------------------------
# Parameters: valid region is random, padded to lane-dense (128-wide) shapes
# with zeros so the padded math matches the unpadded model exactly.
# ---------------------------------------------------------------------------
def _pad2(x, rows, cols):
    out = jnp.zeros((rows, cols), x.dtype)
    return out.at[: x.shape[0], : x.shape[1]].set(x)


def init_params(key):
    k1, k2, k3, k4 = jax.random.split(key, 4)
    return {
        "E_src": _pad2(0.1 * jax.random.normal(k1, (V_SRC, D_MODEL), jnp.float32),
                       V_PAD, D_PAD),
        "E_tgt": _pad2(0.1 * jax.random.normal(k2, (V_TGT, HIDDEN), jnp.float32),
                       V_PAD, H_PAD),
        "W_enc": _pad2(0.1 * jax.random.normal(k3, (D_MODEL, HIDDEN), jnp.float32),
                       D_PAD, H_PAD),
        "b_enc": jnp.zeros((1, H_PAD), jnp.float32),
        "W_out": _pad2(0.1 * jax.random.normal(k4, (HIDDEN, V_TGT), jnp.float32),
                       H_PAD, V_PAD),
        "b_out": jnp.zeros((1, V_PAD), jnp.float32),
    }


if __name__ == "__main__":
    root = jax.random.PRNGKey(0)
    kp, ks, kt = jax.random.split(root, 3)
    params = init_params(kp)
    src_tokens = jax.random.randint(ks, (B, S_ENC), 0, V_SRC, dtype=jnp.int32)
    tgt_tokens = jax.random.randint(kt, (B, S_DEC), 0, V_TGT, dtype=jnp.int32)

    out = batched_enc_dec_forward(params, src_tokens, tgt_tokens,
                                  compute_loss=True, infer=False)
    loss = jax.block_until_ready(out["loss"])
    assert loss.shape == () and jnp.isfinite(loss)
    print("KERNEL_OK")
</pallas_src>

<mosaic_0001>
module attributes {stable_mosaic.version = 11 : i64} {
  func.func @_fused_enc_dec_loss_kernel(%arg0: i32, %arg1: memref<16x1xi32, #tpu.memory_space<vmem>>, %arg2: memref<16x1xi32, #tpu.memory_space<vmem>>, %arg3: memref<128x128xf32, #tpu.memory_space<vmem>>, %arg4: memref<128x128xf32, #tpu.memory_space<vmem>>, %arg5: memref<128x128xf32, #tpu.memory_space<vmem>>, %arg6: memref<1x128xf32, #tpu.memory_space<vmem>>, %arg7: memref<128x128xf32, #tpu.memory_space<vmem>>, %arg8: memref<1x128xf32, #tpu.memory_space<vmem>>, %arg9: memref<1x1xf32, #tpu.memory_space<vmem>>) attributes {dimension_semantics = [#tpu.dimension_semantics<arbitrary>], iteration_bounds = array<i64: 1>, scalar_prefetch = 0 : i64, scratch_operands = 0 : i64, tpu.core_type = #tpu.core_type<tc>, window_params = [{pipeline_mode = #tpu.pipeline_mode<synchronous>, transform_indices = @transform_0, window_bounds = array<i64: 16, 1>}, {pipeline_mode = #tpu.pipeline_mode<synchronous>, transform_indices = @transform_1, window_bounds = array<i64: 16, 1>}, {pipeline_mode = #tpu.pipeline_mode<synchronous>, transform_indices = @transform_2, window_bounds = array<i64: 128, 128>}, {pipeline_mode = #tpu.pipeline_mode<synchronous>, transform_indices = @transform_3, window_bounds = array<i64: 128, 128>}, {pipeline_mode = #tpu.pipeline_mode<synchronous>, transform_indices = @transform_4, window_bounds = array<i64: 128, 128>}, {pipeline_mode = #tpu.pipeline_mode<synchronous>, transform_indices = @transform_5, window_bounds = array<i64: 1, 128>}, {pipeline_mode = #tpu.pipeline_mode<synchronous>, transform_indices = @transform_6, window_bounds = array<i64: 128, 128>}, {pipeline_mode = #tpu.pipeline_mode<synchronous>, transform_indices = @transform_7, window_bounds = array<i64: 1, 128>}, {pipeline_mode = #tpu.pipeline_mode<synchronous>, transform_indices = @transform_8, window_bounds = array<i64: 1, 1>}]} {
    %c0 = arith.constant 0 : index
    %c0_0 = arith.constant 0 : index
    %0 = vector.load %arg1[%c0, %c0_0] : memref<16x1xi32, #tpu.memory_space<vmem>>, vector<16x1xi32>
    %c0_1 = arith.constant 0 : index
    %c0_2 = arith.constant 0 : index
    %1 = vector.load %arg2[%c0_1, %c0_2] : memref<16x1xi32, #tpu.memory_space<vmem>>, vector<16x1xi32>
    %2 = tpu.iota {dimensions = array<i32: 1>} : vector<16x128xi32>
    %3 = tpu.iota {dimensions = array<i32: 1>} : vector<16x128xi32>
    %4 = vector.broadcast %0 : vector<16x1xi32> to vector<16x128xi32>
    %5 = arith.cmpi eq, %2, %4 : vector<16x128xi32>
    %6 = arith.extui %5 : vector<16x128xi1> to vector<16x128xi32>
    %7 = arith.sitofp %6 : vector<16x128xi32> to vector<16x128xf32>
    %8 = vector.broadcast %1 : vector<16x1xi32> to vector<16x128xi32>
    %9 = arith.cmpi eq, %3, %8 : vector<16x128xi32>
    %10 = arith.extui %9 : vector<16x128xi1> to vector<16x128xi32>
    %11 = arith.sitofp %10 : vector<16x128xi32> to vector<16x128xf32>
    %c0_3 = arith.constant 0 : index
    %c0_4 = arith.constant 0 : index
    %12 = vector.load %arg3[%c0_3, %c0_4] : memref<128x128xf32, #tpu.memory_space<vmem>>, vector<128x128xf32>
    %cst = arith.constant dense<0.000000e+00> : vector<16x128xf32>
    %13 = tpu.matmul %7, %12, %cst {dimension_numbers = #tpu.dot_dimension_numbers<[1], [0], [0], [1], [0, 0, 1, 1], [], []>} : vector<16x128xf32>, vector<128x128xf32>, vector<16x128xf32> -> vector<16x128xf32>
    %c0_5 = arith.constant 0 : index
    %c0_6 = arith.constant 0 : index
    %14 = vector.load %arg4[%c0_5, %c0_6] : memref<128x128xf32, #tpu.memory_space<vmem>>, vector<128x128xf32>
    %cst_7 = arith.constant dense<0.000000e+00> : vector<16x128xf32>
    %15 = tpu.matmul %11, %14, %cst_7 {dimension_numbers = #tpu.dot_dimension_numbers<[1], [0], [0], [1], [0, 0, 1, 1], [], []>} : vector<16x128xf32>, vector<128x128xf32>, vector<16x128xf32> -> vector<16x128xf32>
    %c0_8 = arith.constant 0 : index
    %c0_9 = arith.constant 0 : index
    %16 = vector.load %arg5[%c0_8, %c0_9] : memref<128x128xf32, #tpu.memory_space<vmem>>, vector<128x128xf32>
    %cst_10 = arith.constant dense<0.000000e+00> : vector<16x128xf32>
    %17 = tpu.matmul %13, %16, %cst_10 {dimension_numbers = #tpu.dot_dimension_numbers<[1], [0], [0], [1], [0, 0, 1, 1], [], []>} : vector<16x128xf32>, vector<128x128xf32>, vector<16x128xf32> -> vector<16x128xf32>
    %c0_11 = arith.constant 0 : index
    %c0_12 = arith.constant 0 : index
    %18 = vector.load %arg6[%c0_11, %c0_12] : memref<1x128xf32, #tpu.memory_space<vmem>>, vector<1x128xf32>
    %19 = vector.broadcast %18 : vector<1x128xf32> to vector<16x128xf32>
    %20 = arith.addf %17, %19 : vector<16x128xf32>
    %21 = math.tanh %20 : vector<16x128xf32>
    %22 = vector.shape_cast %15 : vector<16x128xf32> to vector<2x8x128xf32>
    %23 = vector.shape_cast %21 : vector<16x128xf32> to vector<2x8x128xf32>
    "tpu.trace_start"() <{level = 10 : i32, message = "bqd,bkd->bqk"}> : () -> ()
    %cst_13 = arith.constant dense<0.000000e+00> : vector<2x8x8xf32>
    %24 = tpu.matmul %22, %23, %cst_13 {dimension_numbers = #tpu.dot_dimension_numbers<[2], [2], [1], [1], [0, 0, 0, 1, 1, 1], [0], [0]>} : vector<2x8x128xf32>, vector<2x8x128xf32>, vector<2x8x8xf32> -> vector<2x8x8xf32>
    "tpu.trace_stop"() : () -> ()
    %cst_14 = arith.constant 0.176776692 : f32
    %25 = vector.broadcast %cst_14 : f32 to vector<2x8x8xf32>
    %26 = arith.mulf %24, %25 : vector<2x8x8xf32>
    %cst_15 = arith.constant dense<0xFF800000> : vector<2x8xf32>
    %27 = vector.multi_reduction <maximumf>, %26, %cst_15 [2] : vector<2x8x8xf32> to vector<2x8xf32>
    %28 = vector.shape_cast %27 : vector<2x8xf32> to vector<2x8x1xf32>
    %29 = vector.broadcast %28 : vector<2x8x1xf32> to vector<2x8x8xf32>
    %30 = arith.subf %26, %29 : vector<2x8x8xf32>
    %31 = math.exp %30 : vector<2x8x8xf32>
    %cst_16 = arith.constant dense<0.000000e+00> : vector<2x8xf32>
    %32 = vector.multi_reduction <add>, %31, %cst_16 [2] : vector<2x8x8xf32> to vector<2x8xf32>
    %33 = vector.shape_cast %32 : vector<2x8xf32> to vector<2x8x1xf32>
    %34 = tpu.reciprocal %33 {approx = true} : vector<2x8x1xf32> -> vector<2x8x1xf32>
    %35 = vector.broadcast %34 : vector<2x8x1xf32> to vector<2x8x8xf32>
    %36 = arith.mulf %31, %35 : vector<2x8x8xf32>
    "tpu.trace_start"() <{level = 10 : i32, message = "bqk,bkd->bqd"}> : () -> ()
    %cst_17 = arith.constant dense<0.000000e+00> : vector<2x8x128xf32>
    %37 = tpu.matmul %36, %23, %cst_17 {dimension_numbers = #tpu.dot_dimension_numbers<[2], [1], [1], [2], [0, 0, 0, 1, 1, 2], [0], [0]>} : vector<2x8x8xf32>, vector<2x8x128xf32>, vector<2x8x128xf32> -> vector<2x8x128xf32>
    "tpu.trace_stop"() : () -> ()
    %38 = arith.addf %22, %37 : vector<2x8x128xf32>
    %39 = math.tanh %38 : vector<2x8x128xf32>
    %40 = vector.shape_cast %39 : vector<2x8x128xf32> to vector<16x128xf32>
    %c0_18 = arith.constant 0 : index
    %c0_19 = arith.constant 0 : index
    %41 = vector.load %arg7[%c0_18, %c0_19] : memref<128x128xf32, #tpu.memory_space<vmem>>, vector<128x128xf32>
    %cst_20 = arith.constant dense<0.000000e+00> : vector<16x128xf32>
    %42 = tpu.matmul %40, %41, %cst_20 {dimension_numbers = #tpu.dot_dimension_numbers<[1], [0], [0], [1], [0, 0, 1, 1], [], []>} : vector<16x128xf32>, vector<128x128xf32>, vector<16x128xf32> -> vector<16x128xf32>
    %c0_21 = arith.constant 0 : index
    %c0_22 = arith.constant 0 : index
    %43 = vector.load %arg8[%c0_21, %c0_22] : memref<1x128xf32, #tpu.memory_space<vmem>>, vector<1x128xf32>
    %44 = vector.broadcast %43 : vector<1x128xf32> to vector<16x128xf32>
    %45 = arith.addf %42, %44 : vector<16x128xf32>
    %c64_i32 = arith.constant 64 : i32
    %46 = vector.broadcast %c64_i32 : i32 to vector<16x128xi32>
    %47 = arith.cmpi slt, %3, %46 : vector<16x128xi32>
    %cst_23 = arith.constant -1.000000e+30 : f32
    %48 = vector.broadcast %cst_23 : f32 to vector<16x128xf32>
    %49 = arith.select %47, %45, %48 : vector<16x128xi1>, vector<16x128xf32>
    %cst_24 = arith.constant dense<0xFF800000> : vector<16xf32>
    %50 = vector.multi_reduction <maximumf>, %49, %cst_24 [1] : vector<16x128xf32> to vector<16xf32>
    %51 = vector.shape_cast %50 : vector<16xf32> to vector<16x1xf32>
    %52 = vector.broadcast %51 : vector<16x1xf32> to vector<16x128xf32>
    %53 = arith.subf %49, %52 : vector<16x128xf32>
    %54 = math.exp %53 : vector<16x128xf32>
    %cst_25 = arith.constant dense<0.000000e+00> : vector<16xf32>
    %55 = vector.multi_reduction <add>, %54, %cst_25 [1] : vector<16x128xf32> to vector<16xf32>
    %56 = vector.shape_cast %55 : vector<16xf32> to vector<16x1xf32>
    %57 = math.log %56 : vector<16x1xf32>
    %58 = arith.addf %51, %57 : vector<16x1xf32>
    %59 = vector.broadcast %1 : vector<16x1xi32> to vector<16x128xi32>
    %60 = arith.cmpi eq, %3, %59 : vector<16x128xi32>
    %cst_26 = arith.constant 0.000000e+00 : f32
    %61 = vector.broadcast %cst_26 : f32 to vector<16x128xf32>
    %62 = arith.select %60, %49, %61 : vector<16x128xi1>, vector<16x128xf32>
    %cst_27 = arith.constant dense<0.000000e+00> : vector<16xf32>
    %63 = vector.multi_reduction <add>, %62, %cst_27 [1] : vector<16x128xf32> to vector<16xf32>
    %64 = vector.shape_cast %63 : vector<16xf32> to vector<16x1xf32>
    %65 = arith.subf %58, %64 : vector<16x1xf32>
    %66 = vector.shape_cast %65 : vector<16x1xf32> to vector<1x16x1xf32>
    %cst_28 = arith.constant dense<0.000000e+00> : vector<1xf32>
    %67 = vector.multi_reduction <add>, %66, %cst_28 [1, 2] : vector<1x16x1xf32> to vector<1xf32>
    %68 = vector.shape_cast %67 : vector<1xf32> to vector<1x1x1xf32>
    %69 = vector.extract %68[0, 0, 0] : f32 from vector<1x1x1xf32>
    %70 = vector.broadcast %69 : f32 to vector<1x1xf32>
    %cst_29 = arith.constant 1.000000e+00 : f32
    %cst_30 = arith.constant 1.600000e+01 : f32
    %71 = arith.divf %cst_29, %cst_30 : f32
    %72 = vector.broadcast %71 : f32 to vector<1x1xf32>
    %73 = arith.mulf %70, %72 : vector<1x1xf32>
    %c0_31 = arith.constant 0 : index
    %c0_32 = arith.constant 0 : index
    %74 = vector.load %arg9[%c0_31, %c0_32] : memref<1x1xf32, #tpu.memory_space<vmem>>, vector<1x1xf32>
    tpu.vector_store %arg9[%c0_31, %c0_32], %73 {strides = array<i32>} : memref<1x1xf32, #tpu.memory_space<vmem>>, vector<1x1xf32>,
    return
  }
  func.func @transform_0(%arg0: i32) -> (i32, i32) {
    %c0_i32 = arith.constant 0 : i32
    %c0_i32_0 = arith.constant 0 : i32
    %c0_i32_1 = arith.constant 0 : i32
    return %c0_i32, %c0_i32_0 : i32, i32
  }
  func.func @transform_1(%arg0: i32) -> (i32, i32) {
    %c0_i32 = arith.constant 0 : i32
    %c0_i32_0 = arith.constant 0 : i32
    %c0_i32_1 = arith.constant 0 : i32
    return %c0_i32, %c0_i32_0 : i32, i32
  }
  func.func @transform_2(%arg0: i32) -> (i32, i32) {
    %c0_i32 = arith.constant 0 : i32
    %c0_i32_0 = arith.constant 0 : i32
    %c0_i32_1 = arith.constant 0 : i32
    return %c0_i32, %c0_i32_0 : i32, i32
  }
  func.func @transform_3(%arg0: i32) -> (i32, i32) {
    %c0_i32 = arith.constant 0 : i32
    %c0_i32_0 = arith.constant 0 : i32
    %c0_i32_1 = arith.constant 0 : i32
    return %c0_i32, %c0_i32_0 : i32, i32
  }
  func.func @transform_4(%arg0: i32) -> (i32, i32) {
    %c0_i32 = arith.constant 0 : i32
    %c0_i32_0 = arith.constant 0 : i32
    %c0_i32_1 = arith.constant 0 : i32
    return %c0_i32, %c0_i32_0 : i32, i32
  }
  func.func @transform_5(%arg0: i32) -> (i32, i32) {
    %c0_i32 = arith.constant 0 : i32
    %c0_i32_0 = arith.constant 0 : i32
    %c0_i32_1 = arith.constant 0 : i32
    return %c0_i32, %c0_i32_0 : i32, i32
  }
  func.func @transform_6(%arg0: i32) -> (i32, i32) {
    %c0_i32 = arith.constant 0 : i32
    %c0_i32_0 = arith.constant 0 : i32
    %c0_i32_1 = arith.constant 0 : i32
    return %c0_i32, %c0_i32_0 : i32, i32
  }
  func.func @transform_7(%arg0: i32) -> (i32, i32) {
    %c0_i32 = arith.constant 0 : i32
    %c0_i32_0 = arith.constant 0 : i32
    %c0_i32_1 = arith.constant 0 : i32
    return %c0_i32, %c0_i32_0 : i32, i32
  }
  func.func @transform_8(%arg0: i32) -> (i32, i32) {
    %c0_i32 = arith.constant 0 : i32
    %c0_i32_0 = arith.constant 0 : i32
    %c0_i32_1 = arith.constant 0 : i32
    return %c0_i32, %c0_i32_0 : i32, i32
  }
}

</mosaic_0001>

<llo_original>
// kernel: tpu_custom_call.1
$region0: #{tpu_custom_call.1}
  #allocation0 [shape = 'u32[]', space=smem, size = 0x4, offset = 0x4, fixed_abs, tag = 'smem constant byte address 0x4 - core index']
  #allocation1 [shape = 'u32[144,128]{1,0:T(1,128)}', space=vmem, size = 0x12000, scoped, tag = 'internal scratch']
  %s0 = inlined_call_operand.vmem [shape: s32[16,1], index: 0, kind: input, shape index: {}]
  %s1 = inlined_call_operand.vmem [shape: s32[16,1], index: 1, kind: input, shape index: {}]
  %s2 = inlined_call_operand.hbm [shape: f32[128,128], index: 2, kind: input, shape index: {}]
  %s3 = inlined_call_operand.hbm [shape: f32[128,128], index: 3, kind: input, shape index: {}]
  %s4 = inlined_call_operand.hbm [shape: f32[128,128], index: 4, kind: input, shape index: {}]
  %s5 = inlined_call_operand.vmem [shape: f32[1,128], index: 5, kind: input, shape index: {}]
  %s6 = inlined_call_operand.hbm [shape: f32[128,128], index: 6, kind: input, shape index: {}]
  %s7 = inlined_call_operand.vmem [shape: f32[1,128], index: 7, kind: input, shape index: {}]
  %s8 = inlined_call_operand.hbm [shape: f32[1,1], index: 8, kind: output, shape index: {}]
  %s9 = sld [smem:[#allocation0]]
  $region58: #{tpu_custom_call.1} parent=0
    _
  %s11 = ssub.s32 1, %s9
  %s12 = scalar_select 0, %s11, %s9
  $region1: #{tpu_custom_call.1} parent=0
    #allocation2 [shape = 'u8[65536]{0}', space=vmem, size = 0x10000, scoped, tag = 'input window, operand 2, single buffered']
    #allocation3 [shape = 's32[1]{0}', space=sflag, size = 0x4, scoped, tag = 'scoped memory for tpu_custom_call.1']
    #allocation4 [shape = 's32[1]{0}', space=sflag, size = 0x4, scoped, tag = 'scoped memory for tpu_custom_call.1']
    #allocation5 [shape = 'u8[65536]{0}', space=vmem, size = 0x10000, scoped, tag = 'input window, operand 3, single buffered']
    #allocation6 [shape = 's32[1]{0}', space=sflag, size = 0x4, scoped, tag = 'scoped memory for tpu_custom_call.1']
    #allocation7 [shape = 'u8[65536]{0}', space=vmem, size = 0x10000, scoped, tag = 'input window, operand 4, single buffered']
    #allocation8 [shape = 'u8[65536]{0}', space=vmem, size = 0x10000, scoped, tag = 'input window, operand 6, single buffered']
    #allocation9 [shape = 's32[1]{0}', space=sflag, size = 0x4, scoped, tag = 'scoped memory for tpu_custom_call.1']
    #allocation10 [shape = 'u8[512]{0}', space=vmem, size = 0x400, scoped, tag = 'output window, operand 0, single buffered']
    %13 = vsyncpa [#allocation3], 0
    %14 = vsyncpa [#allocation6], 0
    %15 = vsyncpa [#allocation9], 0
    %16 = vsyncpa [#allocation4], 0
    // Predicated region
    $region2: #{tpu_custom_call.1} parent=1 // pred_check
      _
    $region3: #{tpu_custom_call.1} parent=1 // pred_check_branch
      %18 = sbr.rel (0) target = $region5
    $region4: #{tpu_custom_call.1} parent=1 // pred_region
      _
    $region5: #{tpu_custom_call.1} parent=1 // pred_fallthru
      _
    // Predicated region
    $region6: #{tpu_custom_call.1} parent=1 // pred_check
      _
    $region7: #{tpu_custom_call.1} parent=1 // pred_check_branch
      %20 = sbr.rel (0) target = $region9
    $region8: #{tpu_custom_call.1} parent=1 // pred_region
      _
    $region9: #{tpu_custom_call.1} parent=1 // pred_fallthru
      _
    // Predicated region
    $region10: #{tpu_custom_call.1} parent=1 // pred_check
      _
    $region11: #{tpu_custom_call.1} parent=1 // pred_check_branch
      %22 = sbr.rel (0) target = $region13
    $region12: #{tpu_custom_call.1} parent=1 // pred_region
      %s24 = ssub.s32 2048, 2048
      %25 = vsyncadd [#allocation3], %s24
      %s26 = sshll.u32 [#allocation2], 4
      %s27 = int_to_ptr.vmem [resolvable:$true] %s26
      %32 = dma.hbm_to_vmem [thread:$0]  %s2, 2048, %s27, [#allocation3], 128, 128, 8
    $region13: #{tpu_custom_call.1} parent=1 // pred_fallthru
      _
    // Predicated region
    $region14: #{tpu_custom_call.1} parent=1 // pred_check
      _
    $region15: #{tpu_custom_call.1} parent=1 // pred_check_branch
      %34 = sbr.rel (0) target = $region17
    $region16: #{tpu_custom_call.1} parent=1 // pred_region
      %s36 = ssub.s32 2048, 2048
      %37 = vsyncadd [#allocation6], %s36
      %s38 = sshll.u32 [#allocation5], 4
      %s39 = int_to_ptr.vmem [resolvable:$true] %s38
      %44 = dma.hbm_to_vmem [thread:$0]  %s3, 2048, %s39, [#allocation6], 128, 128, 8
    $region17: #{tpu_custom_call.1} parent=1 // pred_fallthru
      _
    // Predicated region
    $region18: #{tpu_custom_call.1} parent=1 // pred_check
      _
    $region19: #{tpu_custom_call.1} parent=1 // pred_check_branch
      %46 = sbr.rel (0) target = $region21
    $region20: #{tpu_custom_call.1} parent=1 // pred_region
      %s48 = ssub.s32 2048, 2048
      %49 = vsyncadd [#allocation6], %s48
      %s50 = sshll.u32 [#allocation7], 4
      %s51 = int_to_ptr.vmem [resolvable:$true] %s50
      %56 = dma.hbm_to_vmem [thread:$0]  %s4, 2048, %s51, [#allocation6], 128, 128, 8
    $region21: #{tpu_custom_call.1} parent=1 // pred_fallthru
      _
    // Predicated region
    $region22: #{tpu_custom_call.1} parent=1 // pred_check
      _
    $region23: #{tpu_custom_call.1} parent=1 // pred_check_branch
      %58 = sbr.rel (0) target = $region25
    $region24: #{tpu_custom_call.1} parent=1 // pred_region
      _
    $region25: #{tpu_custom_call.1} parent=1 // pred_fallthru
      _
    // Predicated region
    $region26: #{tpu_custom_call.1} parent=1 // pred_check
      _
    $region27: #{tpu_custom_call.1} parent=1 // pred_check_branch
      %60 = sbr.rel (0) target = $region29
    $region28: #{tpu_custom_call.1} parent=1 // pred_region
      %s62 = ssub.s32 2048, 2048
      %63 = vsyncadd [#allocation9], %s62
      %s64 = sshll.u32 [#allocation8], 4
      %s65 = int_to_ptr.vmem [resolvable:$true] %s64
      %70 = dma.hbm_to_vmem [thread:$0]  %s6, 2048, %s65, [#allocation9], 128, 128, 8
    $region29: #{tpu_custom_call.1} parent=1 // pred_fallthru
      _
    // Predicated region
    $region30: #{tpu_custom_call.1} parent=1 // pred_check
      _
    $region31: #{tpu_custom_call.1} parent=1 // pred_check_branch
      %72 = sbr.rel (0) target = $region33
    $region32: #{tpu_custom_call.1} parent=1 // pred_region
      _
    $region33: #{tpu_custom_call.1} parent=1 // pred_fallthru
      _
    // Predicated region
    $region34: #{tpu_custom_call.1} parent=1 // pred_check
      _
    $region35: #{tpu_custom_call.1} parent=1 // pred_check_branch
      %74 = sbr.rel (0) target = $region37
    $region36: #{tpu_custom_call.1} parent=1 // pred_region
      %75 = dma.done [#allocation3], 2048
    $region37: #{tpu_custom_call.1} parent=1 // pred_fallthru
      _
    // Predicated region
    $region38: #{tpu_custom_call.1} parent=1 // pred_check
      _
    $region39: #{tpu_custom_call.1} parent=1 // pred_check_branch
      %77 = sbr.rel (0) target = $region41
    $region40: #{tpu_custom_call.1} parent=1 // pred_region
      %78 = dma.done [#allocation6], 2048
    $region41: #{tpu_custom_call.1} parent=1 // pred_fallthru
      _
    // Predicated region
    $region42: #{tpu_custom_call.1} parent=1 // pred_check
      _
    $region43: #{tpu_custom_call.1} parent=1 // pred_check_branch
      %80 = sbr.rel (0) target = $region45
    $region44: #{tpu_custom_call.1} parent=1 // pred_region
      %81 = dma.done [#allocation6], 2048
    $region45: #{tpu_custom_call.1} parent=1 // pred_fallthru
      _
    // Predicated region
    $region46: #{tpu_custom_call.1} parent=1 // pred_check
      _
    $region47: #{tpu_custom_call.1} parent=1 // pred_check_branch
      %83 = sbr.rel (0) target = $region49
    $region48: #{tpu_custom_call.1} parent=1 // pred_region
      %84 = dma.done [#allocation9], 2048
    $region49: #{tpu_custom_call.1} parent=1 // pred_fallthru
      _
    %v85 = vld [vmem:[%s0] sm:$0xff]
    %v86 = vld [vmem:[%s0 + $0x8] sm:$0xff]
    %v87 = vld [vmem:[%s1] sm:$0xff]
    %v88 = vld [vmem:[%s1 + $0x8] sm:$0xff]
    %v89 = vlaneseq
    %v90 = vand.u32 %v89, 127
    %91 = vset.pattern.permute.xlu0 0
    %92 = vperm.xlu0 %91, %v85
    %v93 = vpop.permute.xlu0 %92
    %94 = vset.pattern.permute.xlu0 0
    %95 = vperm.xlu0 %94, %v86
    %v96 = vpop.permute.xlu0 %95
    %vm97 = vcmp.eq.s32.totalorder %v90, %v93
    %vm98 = vcmp.eq.s32.totalorder %v90, %v96
    %v99 = vsel %vm97, 1, 0
    %v100 = vsel %vm98, 1, 0
    %v101 = vcvt.s32.f32 %v99
    %v102 = vcvt.s32.f32 %v100
    %103 = vset.pattern.permute.xlu0 0
    %104 = vperm.xlu0 %103, %v87
    %v105 = vpop.permute.xlu0 %104
    %106 = vset.pattern.permute.xlu0 0
    %107 = vperm.xlu0 %106, %v88
    %v108 = vpop.permute.xlu0 %107
    %vm109 = vcmp.eq.s32.totalorder %v90, %v105
    %vm110 = vcmp.eq.s32.totalorder %v90, %v108
    %v111 = vsel %vm109, 1, 0
    %v112 = vsel %vm110, 1, 0
    %v113 = vcvt.s32.f32 %v111
    %v114 = vcvt.s32.f32 %v112
    %v115 = vld [vmem:[#allocation2] sm:$0xff]
    %v116 = vld [vmem:[#allocation2 + $0x8] sm:$0xff]
    %v117 = vld [vmem:[#allocation2 + $0x10] sm:$0xff]
    %v118 = vld [vmem:[#allocation2 + $0x18] sm:$0xff]
    %v119 = vld [vmem:[#allocation2 + $0x20] sm:$0xff]
    %v120 = vld [vmem:[#allocation2 + $0x28] sm:$0xff]
    %v121 = vld [vmem:[#allocation2 + $0x30] sm:$0xff]
    %v122 = vld [vmem:[#allocation2 + $0x38] sm:$0xff]
    %v123 = vld [vmem:[#allocation2 + $0x40] sm:$0xff]
    %v124 = vld [vmem:[#allocation2 + $0x48] sm:$0xff]
    %v125 = vld [vmem:[#allocation2 + $0x50] sm:$0xff]
    %v126 = vld [vmem:[#allocation2 + $0x58] sm:$0xff]
    %v127 = vld [vmem:[#allocation2 + $0x60] sm:$0xff]
    %v128 = vld [vmem:[#allocation2 + $0x68] sm:$0xff]
    %v129 = vld [vmem:[#allocation2 + $0x70] sm:$0xff]
    %v130 = vld [vmem:[#allocation2 + $0x78] sm:$0xff]
    %131 = vmatprep.subr.mxu0 0.0
    %132 = vmatpush1.msra.mxu0 %v130
    %133 = vmatprep.subr.mxu0 0.0
    %134 = vmatpush1.msra.mxu0 %v129
    %135 = vmatprep.subr.mxu0 0.0
    %136 = vmatpush1.msra.mxu0 %v128
    %137 = vmatprep.subr.mxu0 0.0
    %138 = vmatpush1.msra.mxu0 %v127
    %139 = vmatprep.subr.mxu0 0.0
    %140 = vmatpush1.msra.mxu0 %v126
    %141 = vmatprep.subr.mxu0 0.0
    %142 = vmatpush1.msra.mxu0 %v125
    %143 = vmatprep.subr.mxu0 0.0
    %144 = vmatpush1.msra.mxu0 %v124
    %145 = vmatprep.subr.mxu0 0.0
    %146 = vmatpush1.msra.mxu0 %v123
    %147 = vmatprep.subr.mxu0 0.0
    %148 = vmatpush1.msra.mxu0 %v122
    %149 = vmatprep.subr.mxu0 0.0
    %150 = vmatpush1.msra.mxu0 %v121
    %151 = vmatprep.subr.mxu0 0.0
    %152 = vmatpush1.msra.mxu0 %v120
    %153 = vmatprep.subr.mxu0 0.0
    %154 = vmatpush1.msra.mxu0 %v119
    %155 = vmatprep.subr.mxu0 0.0
    %156 = vmatpush1.msra.mxu0 %v118
    %157 = vmatprep.subr.mxu0 0.0
    %158 = vmatpush1.msra.mxu0 %v117
    %159 = vmatprep.subr.mxu0 0.0
    %160 = vmatpush1.msra.mxu0 %v116
    %161 = vmatprep.subr.mxu0 0.0
    %162 = vmatpush1.msra.mxu0 %v115
    %163 = vmatprep.subr.mxu0 0.0
    %164 = vmatpush2.msra.mxu0 0.0
    %165 = vmatprep.subr.mxu0 0.0
    %166 = vmatpush2.msra.mxu0 0.0
    %167 = vmatprep.subr.mxu0 0.0
    %168 = vmatpush2.msra.mxu0 0.0
    %169 = vmatprep.subr.mxu0 0.0
    %170 = vmatpush2.msra.mxu0 0.0
    %171 = vmatprep.subr.mxu0 0.0
    %172 = vmatpush2.msra.mxu0 0.0
    %173 = vmatprep.subr.mxu0 0.0
    %174 = vmatpush2.msra.mxu0 0.0
    %175 = vmatprep.subr.mxu0 0.0
    %176 = vmatpush2.msra.mxu0 0.0
    %177 = vmatprep.subr.mxu0 0.0
    %178 = vmatpush2.msra.mxu0 0.0
    %179 = vmatprep.subr.mxu0 0.0
    %180 = vmatpush2.msra.mxu0 0.0
    %181 = vmatprep.subr.mxu0 0.0
    %182 = vmatpush2.msra.mxu0 0.0
    %183 = vmatprep.subr.mxu0 0.0
    %184 = vmatpush2.msra.mxu0 0.0
    %185 = vmatprep.subr.mxu0 0.0
    %186 = vmatpush2.msra.mxu0 0.0
    %187 = vmatprep.subr.mxu0 0.0
    %188 = vmatpush2.msra.mxu0 0.0
    %189 = vmatprep.subr.mxu0 0.0
    %190 = vmatpush2.msra.mxu0 0.0
    %191 = vmatprep.subr.mxu0 0.0
    %192 = vmatpush2.msra.mxu0 0.0
    %193 = vmatprep.subr.mxu0 0.0
    %194 = vmatpush2.msra.mxu0 0.0
    %195 = vmatprep.mubr.f32.mxu0 0.0
    %196 = vmatmul.mubr.f32.gmra.mxu0 %v101
    %v197 = vpop.f32.mrf.mxu0
    %v198 = vadd.f32 0.0, %v197
    %v199 = vpop.f32.mrf.mxu0
    %200 = vmatprep.mubr.f32.mxu0 0.0
    %201 = vmatmul.mubr.f32.gmra.mxu0 %v102
    %v202 = vpop.f32.mrf.mxu0
    %v203 = vadd.f32 0.0, %v202
    %v204 = vpop.f32.mrf.mxu0
    %205 = vdwg.mxu0
    %v206 = vld [vmem:[#allocation5] sm:$0xff]
    %v207 = vld [vmem:[#allocation5 + $0x8] sm:$0xff]
    %v208 = vld [vmem:[#allocation5 + $0x10] sm:$0xff]
    %v209 = vld [vmem:[#allocation5 + $0x18] sm:$0xff]
    %v210 = vld [vmem:[#allocation5 + $0x20] sm:$0xff]
    %v211 = vld [vmem:[#allocation5 + $0x28] sm:$0xff]
    %v212 = vld [vmem:[#allocation5 + $0x30] sm:$0xff]
    %v213 = vld [vmem:[#allocation5 + $0x38] sm:$0xff]
    %v214 = vld [vmem:[#allocation5 + $0x40] sm:$0xff]
    %v215 = vld [vmem:[#allocation5 + $0x48] sm:$0xff]
    %v216 = vld [vmem:[#allocation5 + $0x50] sm:$0xff]
    %v217 = vld [vmem:[#allocation5 + $0x58] sm:$0xff]
    %v218 = vld [vmem:[#allocation5 + $0x60] sm:$0xff]
    %v219 = vld [vmem:[#allocation5 + $0x68] sm:$0xff]
    %v220 = vld [vmem:[#allocation5 + $0x70] sm:$0xff]
    %v221 = vld [vmem:[#allocation5 + $0x78] sm:$0xff]
    %222 = vmatprep.subr.mxu0 0.0
    %223 = vmatpush1.msra.mxu0 %v221
    %224 = vmatprep.subr.mxu0 0.0
    %225 = vmatpush1.msra.mxu0 %v220
    %226 = vmatprep.subr.mxu0 0.0
    %227 = vmatpush1.msra.mxu0 %v219
    %228 = vmatprep.subr.mxu0 0.0
    %229 = vmatpush1.msra.mxu0 %v218
    %230 = vmatprep.subr.mxu0 0.0
    %231 = vmatpush1.msra.mxu0 %v217
    %232 = vmatprep.subr.mxu0 0.0
    %233 = vmatpush1.msra.mxu0 %v216
    %234 = vmatprep.subr.mxu0 0.0
    %235 = vmatpush1.msra.mxu0 %v215
    %236 = vmatprep.subr.mxu0 0.0
    %237 = vmatpush1.msra.mxu0 %v214
    %238 = vmatprep.subr.mxu0 0.0
    %239 = vmatpush1.msra.mxu0 %v213
    %240 = vmatprep.subr.mxu0 0.0
    %241 = vmatpush1.msra.mxu0 %v212
    %242 = vmatprep.subr.mxu0 0.0
    %243 = vmatpush1.msra.mxu0 %v211
    %244 = vmatprep.subr.mxu0 0.0
    %245 = vmatpush1.msra.mxu0 %v210
    %246 = vmatprep.subr.mxu0 0.0
    %247 = vmatpush1.msra.mxu0 %v209
    %248 = vmatprep.subr.mxu0 0.0
    %249 = vmatpush1.msra.mxu0 %v208
    %250 = vmatprep.subr.mxu0 0.0
    %251 = vmatpush1.msra.mxu0 %v207
    %252 = vmatprep.subr.mxu0 0.0
    %253 = vmatpush1.msra.mxu0 %v206
    %254 = vmatprep.subr.mxu0 0.0
    %255 = vmatpush2.msra.mxu0 0.0
    %256 = vmatprep.subr.mxu0 0.0
    %257 = vmatpush2.msra.mxu0 0.0
    %258 = vmatprep.subr.mxu0 0.0
    %259 = vmatpush2.msra.mxu0 0.0
    %260 = vmatprep.subr.mxu0 0.0
    %261 = vmatpush2.msra.mxu0 0.0
    %262 = vmatprep.subr.mxu0 0.0
    %263 = vmatpush2.msra.mxu0 0.0
    %264 = vmatprep.subr.mxu0 0.0
    %265 = vmatpush2.msra.mxu0 0.0
    %266 = vmatprep.subr.mxu0 0.0
    %267 = vmatpush2.msra.mxu0 0.0
    %268 = vmatprep.subr.mxu0 0.0
    %269 = vmatpush2.msra.mxu0 0.0
    %270 = vmatprep.subr.mxu0 0.0
    %271 = vmatpush2.msra.mxu0 0.0
    %272 = vmatprep.subr.mxu0 0.0
    %273 = vmatpush2.msra.mxu0 0.0
    %274 = vmatprep.subr.mxu0 0.0
    %275 = vmatpush2.msra.mxu0 0.0
    %276 = vmatprep.subr.mxu0 0.0
    %277 = vmatpush2.msra.mxu0 0.0
    %278 = vmatprep.subr.mxu0 0.0
    %279 = vmatpush2.msra.mxu0 0.0
    %280 = vmatprep.subr.mxu0 0.0
    %281 = vmatpush2.msra.mxu0 0.0
    %282 = vmatprep.subr.mxu0 0.0
    %283 = vmatpush2.msra.mxu0 0.0
    %284 = vmatprep.subr.mxu0 0.0
    %285 = vmatpush2.msra.mxu0 0.0
    %286 = vmatprep.mubr.f32.mxu0 0.0
    %287 = vmatmul.mubr.f32.gmra.mxu0 %v113
    %v288 = vpop.f32.mrf.mxu0
    %v289 = vadd.f32 0.0, %v288
    %v290 = vpop.f32.mrf.mxu0
    %291 = vmatprep.mubr.f32.mxu0 0.0
    %292 = vmatmul.mubr.f32.gmra.mxu0 %v114
    %v293 = vpop.f32.mrf.mxu0
    %v294 = vadd.f32 0.0, %v293
    %v295 = vpop.f32.mrf.mxu0
    %296 = vdwg.mxu0
    %v297 = vld [vmem:[#allocation7] sm:$0xff]
    %v298 = vld [vmem:[#allocation7 + $0x8] sm:$0xff]
    %v299 = vld [vmem:[#allocation7 + $0x10] sm:$0xff]
    %v300 = vld [vmem:[#allocation7 + $0x18] sm:$0xff]
    %v301 = vld [vmem:[#allocation7 + $0x20] sm:$0xff]
    %v302 = vld [vmem:[#allocation7 + $0x28] sm:$0xff]
    %v303 = vld [vmem:[#allocation7 + $0x30] sm:$0xff]
    %v304 = vld [vmem:[#allocation7 + $0x38] sm:$0xff]
    %v305 = vld [vmem:[#allocation7 + $0x40] sm:$0xff]
    %v306 = vld [vmem:[#allocation7 + $0x48] sm:$0xff]
    %v307 = vld [vmem:[#allocation7 + $0x50] sm:$0xff]
    %v308 = vld [vmem:[#allocation7 + $0x58] sm:$0xff]
    %v309 = vld [vmem:[#allocation7 + $0x60] sm:$0xff]
    %v310 = vld [vmem:[#allocation7 + $0x68] sm:$0xff]
    %v311 = vld [vmem:[#allocation7 + $0x70] sm:$0xff]
    %v312 = vld [vmem:[#allocation7 + $0x78] sm:$0xff]
    %v313 = vld [vmem:[%s5] sm:$0x1]
    %v315 = vlaneseq
    %v316 = vshrl.u32 %v315, 7
    %v317 = vsub.s32 0, %v316
    %v318 = vrot.slane %v313, %v317
    %320 = vmatprep.subr.mxu0 0.0
    %321 = vmatpush1.msra.mxu0 %v312
    %322 = vmatprep.subr.mxu0 0.0
    %323 = vmatpush1.msra.mxu0 %v311
    %324 = vmatprep.subr.mxu0 0.0
    %325 = vmatpush1.msra.mxu0 %v310
    %326 = vmatprep.subr.mxu0 0.0
    %327 = vmatpush1.msra.mxu0 %v309
    %328 = vmatprep.subr.mxu0 0.0
    %329 = vmatpush1.msra.mxu0 %v308
    %330 = vmatprep.subr.mxu0 0.0
    %331 = vmatpush1.msra.mxu0 %v307
    %332 = vmatprep.subr.mxu0 0.0
    %333 = vmatpush1.msra.mxu0 %v306
    %334 = vmatprep.subr.mxu0 0.0
    %335 = vmatpush1.msra.mxu0 %v305
    %336 = vmatprep.subr.mxu0 0.0
    %337 = vmatpush1.msra.mxu0 %v304
    %338 = vmatprep.subr.mxu0 0.0
    %339 = vmatpush1.msra.mxu0 %v303
    %340 = vmatprep.subr.mxu0 0.0
    %341 = vmatpush1.msra.mxu0 %v302
    %342 = vmatprep.subr.mxu0 0.0
    %343 = vmatpush1.msra.mxu0 %v301
    %344 = vmatprep.subr.mxu0 0.0
    %345 = vmatpush1.msra.mxu0 %v300
    %346 = vmatprep.subr.mxu0 0.0
    %347 = vmatpush1.msra.mxu0 %v299
    %348 = vmatprep.subr.mxu0 0.0
    %349 = vmatpush1.msra.mxu0 %v298
    %350 = vmatprep.subr.mxu0 0.0
    %351 = vmatpush1.msra.mxu0 %v297
    %352 = vmatprep.subr.mxu0 0.0
    %353 = vmatpush2.msra.mxu0 0.0
    %354 = vmatprep.subr.mxu0 0.0
    %355 = vmatpush2.msra.mxu0 0.0
    %356 = vmatprep.subr.mxu0 0.0
    %357 = vmatpush2.msra.mxu0 0.0
    %358 = vmatprep.subr.mxu0 0.0
    %359 = vmatpush2.msra.mxu0 0.0
    %360 = vmatprep.subr.mxu0 0.0
    %361 = vmatpush2.msra.mxu0 0.0
    %362 = vmatprep.subr.mxu0 0.0
    %363 = vmatpush2.msra.mxu0 0.0
    %364 = vmatprep.subr.mxu0 0.0
    %365 = vmatpush2.msra.mxu0 0.0
    %366 = vmatprep.subr.mxu0 0.0
    %367 = vmatpush2.msra.mxu0 0.0
    %368 = vmatprep.subr.mxu0 0.0
    %369 = vmatpush2.msra.mxu0 0.0
    %370 = vmatprep.subr.mxu0 0.0
    %371 = vmatpush2.msra.mxu0 0.0
    %372 = vmatprep.subr.mxu0 0.0
    %373 = vmatpush2.msra.mxu0 0.0
    %374 = vmatprep.subr.mxu0 0.0
    %375 = vmatpush2.msra.mxu0 0.0
    %376 = vmatprep.subr.mxu0 0.0
    %377 = vmatpush2.msra.mxu0 0.0
    %378 = vmatprep.subr.mxu0 0.0
    %379 = vmatpush2.msra.mxu0 0.0
    %380 = vmatprep.subr.mxu0 0.0
    %381 = vmatpush2.msra.mxu0 0.0
    %382 = vmatprep.subr.mxu0 0.0
    %383 = vmatpush2.msra.mxu0 0.0
    %384 = vmatprep.mubr.f32.mxu0 0.0
    %385 = vmatmul.mubr.f32.gmra.mxu0 %v198
    %v386 = vpop.f32.mrf.mxu0
    %v387 = vadd.f32 %v318, %v386
    %v388 = vpop.f32.mrf.mxu0
    %389 = vmatprep.mubr.f32.mxu0 0.0
    %390 = vmatmul.mubr.f32.gmra.mxu0 %v203
    %v391 = vpop.f32.mrf.mxu0
    %v392 = vadd.f32 %v318, %v391
    %v393 = vpop.f32.mrf.mxu0
    %394 = vdwg.mxu0
    %v395 = vtanh.pop %v387
    %v396 = vtanh.pop %v392
    %397 = vmatprep.subr.mxu0 0.0
    %398 = vmatpush1.xpose.msra.mxu0 0.0
    %399 = vmatprep.subr.mxu0 0.0
    %400 = vmatpush1.xpose.msra.mxu0 0.0
    %401 = vmatprep.subr.mxu0 0.0
    %402 = vmatpush1.xpose.msra.mxu0 0.0
    %403 = vmatprep.subr.mxu0 0.0
    %404 = vmatpush1.xpose.msra.mxu0 0.0
    %405 = vmatprep.subr.mxu0 0.0
    %406 = vmatpush1.xpose.msra.mxu0 0.0
    %407 = vmatprep.subr.mxu0 0.0
    %408 = vmatpush1.xpose.msra.mxu0 0.0
    %409 = vmatprep.subr.mxu0 0.0
    %410 = vmatpush1.xpose.msra.mxu0 0.0
    %411 = vmatprep.subr.mxu0 0.0
    %412 = vmatpush1.xpose.msra.mxu0 0.0
    %413 = vmatprep.subr.mxu0 0.0
    %414 = vmatpush1.xpose.msra.mxu0 0.0
    %415 = vmatprep.subr.mxu0 0.0
    %416 = vmatpush1.xpose.msra.mxu0 0.0
    %417 = vmatprep.subr.mxu0 0.0
    %418 = vmatpush1.xpose.msra.mxu0 0.0
    %419 = vmatprep.subr.mxu0 0.0
    %420 = vmatpush1.xpose.msra.mxu0 0.0
    %421 = vmatprep.subr.mxu0 0.0
    %422 = vmatpush1.xpose.msra.mxu0 0.0
    %423 = vmatprep.subr.mxu0 0.0
    %424 = vmatpush1.xpose.msra.mxu0 0.0
    %425 = vmatprep.subr.mxu0 0.0
    %426 = vmatpush1.xpose.msra.mxu0 0.0
    %427 = vmatprep.subr.mxu0 0.0
    %428 = vmatpush1.xpose.msra.mxu0 %v395
    %429 = vmatprep.subr.mxu0 0.0
    %430 = vmatpush2.xpose.msra.mxu0 0.0
    %431 = vmatprep.subr.mxu0 0.0
    %432 = vmatpush2.xpose.msra.mxu0 0.0
    %433 = vmatprep.subr.mxu0 0.0
    %434 = vmatpush2.xpose.msra.mxu0 0.0
    %435 = vmatprep.subr.mxu0 0.0
    %436 = vmatpush2.xpose.msra.mxu0 0.0
    %437 = vmatprep.subr.mxu0 0.0
    %438 = vmatpush2.xpose.msra.mxu0 0.0
    %439 = vmatprep.subr.mxu0 0.0
    %440 = vmatpush2.xpose.msra.mxu0 0.0
    %441 = vmatprep.subr.mxu0 0.0
    %442 = vmatpush2.xpose.msra.mxu0 0.0
    %443 = vmatprep.subr.mxu0 0.0
    %444 = vmatpush2.xpose.msra.mxu0 0.0
    %445 = vmatprep.subr.mxu0 0.0
    %446 = vmatpush2.xpose.msra.mxu0 0.0
    %447 = vmatprep.subr.mxu0 0.0
    %448 = vmatpush2.xpose.msra.mxu0 0.0
    %449 = vmatprep.subr.mxu0 0.0
    %450 = vmatpush2.xpose.msra.mxu0 0.0
    %451 = vmatprep.subr.mxu0 0.0
    %452 = vmatpush2.xpose.msra.mxu0 0.0
    %453 = vmatprep.subr.mxu0 0.0
    %454 = vmatpush2.xpose.msra.mxu0 0.0
    %455 = vmatprep.subr.mxu0 0.0
    %456 = vmatpush2.xpose.msra.mxu0 0.0
    %457 = vmatprep.subr.mxu0 0.0
    %458 = vmatpush2.xpose.msra.mxu0 0.0
    %459 = vmatprep.subr.mxu0 0.0
    %460 = vmatpush2.xpose.msra.mxu0 0.0
    %461 = vmatprep.mubr.f32.mxu0 0.0
    %462 = vmatmul.mubr.f32.gmra.mxu0 %v289
    %v463 = vpop.f32.mrf.mxu0
    %v464 = vadd.f32 0.0, %v463
    %v465 = vpop.f32.mrf.mxu0
    %466 = vdwg.mxu0
    %467 = vmatprep.subr.mxu0 0.0
    %468 = vmatpush1.xpose.msra.mxu0 0.0
    %469 = vmatprep.subr.mxu0 0.0
    %470 = vmatpush1.xpose.msra.mxu0 0.0
    %471 = vmatprep.subr.mxu0 0.0
    %472 = vmatpush1.xpose.msra.mxu0 0.0
    %473 = vmatprep.subr.mxu0 0.0
    %474 = vmatpush1.xpose.msra.mxu0 0.0
    %475 = vmatprep.subr.mxu0 0.0
    %476 = vmatpush1.xpose.msra.mxu0 0.0
    %477 = vmatprep.subr.mxu0 0.0
    %478 = vmatpush1.xpose.msra.mxu0 0.0
    %479 = vmatprep.subr.mxu0 0.0
    %480 = vmatpush1.xpose.msra.mxu0 0.0
    %481 = vmatprep.subr.mxu0 0.0
    %482 = vmatpush1.xpose.msra.mxu0 0.0
    %483 = vmatprep.subr.mxu0 0.0
    %484 = vmatpush1.xpose.msra.mxu0 0.0
    %485 = vmatprep.subr.mxu0 0.0
    %486 = vmatpush1.xpose.msra.mxu0 0.0
    %487 = vmatprep.subr.mxu0 0.0
    %488 = vmatpush1.xpose.msra.mxu0 0.0
    %489 = vmatprep.subr.mxu0 0.0
    %490 = vmatpush1.xpose.msra.mxu0 0.0
    %491 = vmatprep.subr.mxu0 0.0
    %492 = vmatpush1.xpose.msra.mxu0 0.0
    %493 = vmatprep.subr.mxu0 0.0
    %494 = vmatpush1.xpose.msra.mxu0 0.0
    %495 = vmatprep.subr.mxu0 0.0
    %496 = vmatpush1.xpose.msra.mxu0 0.0
    %497 = vmatprep.subr.mxu0 0.0
    %498 = vmatpush1.xpose.msra.mxu0 %v396
    %499 = vmatprep.subr.mxu0 0.0
    %500 = vmatpush2.xpose.msra.mxu0 0.0
    %501 = vmatprep.subr.mxu0 0.0
    %502 = vmatpush2.xpose.msra.mxu0 0.0
    %503 = vmatprep.subr.mxu0 0.0
    %504 = vmatpush2.xpose.msra.mxu0 0.0
    %505 = vmatprep.subr.mxu0 0.0
    %506 = vmatpush2.xpose.msra.mxu0 0.0
    %507 = vmatprep.subr.mxu0 0.0
    %508 = vmatpush2.xpose.msra.mxu0 0.0
    %509 = vmatprep.subr.mxu0 0.0
    %510 = vmatpush2.xpose.msra.mxu0 0.0
    %511 = vmatprep.subr.mxu0 0.0
    %512 = vmatpush2.xpose.msra.mxu0 0.0
    %513 = vmatprep.subr.mxu0 0.0
    %514 = vmatpush2.xpose.msra.mxu0 0.0
    %515 = vmatprep.subr.mxu0 0.0
    %516 = vmatpush2.xpose.msra.mxu0 0.0
    %517 = vmatprep.subr.mxu0 0.0
    %518 = vmatpush2.xpose.msra.mxu0 0.0
    %519 = vmatprep.subr.mxu0 0.0
    %520 = vmatpush2.xpose.msra.mxu0 0.0
    %521 = vmatprep.subr.mxu0 0.0
    %522 = vmatpush2.xpose.msra.mxu0 0.0
    %523 = vmatprep.subr.mxu0 0.0
    %524 = vmatpush2.xpose.msra.mxu0 0.0
    %525 = vmatprep.subr.mxu0 0.0
    %526 = vmatpush2.xpose.msra.mxu0 0.0
    %527 = vmatprep.subr.mxu0 0.0
    %528 = vmatpush2.xpose.msra.mxu0 0.0
    %529 = vmatprep.subr.mxu0 0.0
    %530 = vmatpush2.xpose.msra.mxu0 0.0
    %531 = vmatprep.mubr.f32.mxu0 0.0
    %532 = vmatmul.mubr.f32.gmra.mxu0 %v294
    %v533 = vpop.f32.mrf.mxu0
    %v534 = vadd.f32 0.0, %v533
    %v535 = vpop.f32.mrf.mxu0
    %536 = vdwg.mxu0
    %v537 = vmul.f32 %v464, 0.17677669
    %v538 = vmul.f32 %v534, 0.17677669
    %vm539 = vcmask 64512
    %v540 = vsel %vm539, %v537, -inf
    %541 = vmax.xlane.f32.xlu0 %v540
    %v542 = vpop.xlane.xlu0 %541
    %v543 = vsel %vm539, %v538, -inf
    %544 = vmax.xlane.f32.xlu0 %v543
    %v545 = vpop.xlane.xlu0 %544
    %v546 = vsub.f32 %v537, %v542
    %v547 = vsub.f32 %v538, %v545
    %v548 = vmul.f32 %v546, 1.442695
    %v549 = vpow.pop %v548
    %v550 = vmul.f32 %v547, 1.442695
    %v551 = vpow.pop %v550
    %v552 = vsel %vm539, %v549, 0.0
    %553 = vadd.xlane.f32.xlu0 %v552
    %v554 = vpop.xlane.xlu0 %553
    %v555 = vsel %vm539, %v551, 0.0
    %556 = vadd.xlane.f32.xlu0 %v555
    %v557 = vpop.xlane.xlu0 %556
    %v558 = vrcp.pop %v554
    %v559 = vrcp.pop %v557
    %v560 = vmul.f32 %v549, %v558
    %v561 = vmul.f32 %v551, %v559
    %v563 = vsel %vm539, %v560, 0
    %565 = vmatprep.subr.mxu0 0.0
    %566 = vmatpush1.msra.mxu0 0.0
    %567 = vmatprep.subr.mxu0 0.0
    %568 = vmatpush1.msra.mxu0 0.0
    %569 = vmatprep.subr.mxu0 0.0
    %570 = vmatpush1.msra.mxu0 0.0
    %571 = vmatprep.subr.mxu0 0.0
    %572 = vmatpush1.msra.mxu0 0.0
    %573 = vmatprep.subr.mxu0 0.0
    %574 = vmatpush1.msra.mxu0 0.0
    %575 = vmatprep.subr.mxu0 0.0
    %576 = vmatpush1.msra.mxu0 0.0
    %577 = vmatprep.subr.mxu0 0.0
    %578 = vmatpush1.msra.mxu0 0.0
    %579 = vmatprep.subr.mxu0 0.0
    %580 = vmatpush1.msra.mxu0 0.0
    %581 = vmatprep.subr.mxu0 0.0
    %582 = vmatpush1.msra.mxu0 0.0
    %583 = vmatprep.subr.mxu0 0.0
    %584 = vmatpush1.msra.mxu0 0.0
    %585 = vmatprep.subr.mxu0 0.0
    %586 = vmatpush1.msra.mxu0 0.0
    %587 = vmatprep.subr.mxu0 0.0
    %588 = vmatpush1.msra.mxu0 0.0
    %589 = vmatprep.subr.mxu0 0.0
    %590 = vmatpush1.msra.mxu0 0.0
    %591 = vmatprep.subr.mxu0 0.0
    %592 = vmatpush1.msra.mxu0 0.0
    %593 = vmatprep.subr.mxu0 0.0
    %594 = vmatpush1.msra.mxu0 0.0
    %595 = vmatprep.subr.mxu0 0.0
    %596 = vmatpush1.msra.mxu0 %v395
    %597 = vmatprep.subr.mxu0 0.0
    %598 = vmatpush2.msra.mxu0 0.0
    %599 = vmatprep.subr.mxu0 0.0
    %600 = vmatpush2.msra.mxu0 0.0
    %601 = vmatprep.subr.mxu0 0.0
    %602 = vmatpush2.msra.mxu0 0.0
    %603 = vmatprep.subr.mxu0 0.0
    %604 = vmatpush2.msra.mxu0 0.0
    %605 = vmatprep.subr.mxu0 0.0
    %606 = vmatpush2.msra.mxu0 0.0
    %607 = vmatprep.subr.mxu0 0.0
    %608 = vmatpush2.msra.mxu0 0.0
    %609 = vmatprep.subr.mxu0 0.0
    %610 = vmatpush2.msra.mxu0 0.0
    %611 = vmatprep.subr.mxu0 0.0
    %612 = vmatpush2.msra.mxu0 0.0
    %613 = vmatprep.subr.mxu0 0.0
    %614 = vmatpush2.msra.mxu0 0.0
    %615 = vmatprep.subr.mxu0 0.0
    %616 = vmatpush2.msra.mxu0 0.0
    %617 = vmatprep.subr.mxu0 0.0
    %618 = vmatpush2.msra.mxu0 0.0
    %619 = vmatprep.subr.mxu0 0.0
    %620 = vmatpush2.msra.mxu0 0.0
    %621 = vmatprep.subr.mxu0 0.0
    %622 = vmatpush2.msra.mxu0 0.0
    %623 = vmatprep.subr.mxu0 0.0
    %624 = vmatpush2.msra.mxu0 0.0
    %625 = vmatprep.subr.mxu0 0.0
    %626 = vmatpush2.msra.mxu0 0.0
    %627 = vmatprep.subr.mxu0 0.0
    %628 = vmatpush2.msra.mxu0 0.0
    %629 = vmatprep.mubr.f32.mxu0 0.0
    %630 = vmatmul.mubr.f32.gmra.mxu0 %v563
    %v631 = vpop.f32.mrf.mxu0
    %v632 = vadd.f32 0.0, %v631
    %v633 = vpop.f32.mrf.mxu0
    %634 = vdwg.mxu0
    %v636 = vsel %vm539, %v561, 0
    %638 = vmatprep.subr.mxu0 0.0
    %639 = vmatpush1.msra.mxu0 0.0
    %640 = vmatprep.subr.mxu0 0.0
    %641 = vmatpush1.msra.mxu0 0.0
    %642 = vmatprep.subr.mxu0 0.0
    %643 = vmatpush1.msra.mxu0 0.0
    %644 = vmatprep.subr.mxu0 0.0
    %645 = vmatpush1.msra.mxu0 0.0
    %646 = vmatprep.subr.mxu0 0.0
    %647 = vmatpush1.msra.mxu0 0.0
    %648 = vmatprep.subr.mxu0 0.0
    %649 = vmatpush1.msra.mxu0 0.0
    %650 = vmatprep.subr.mxu0 0.0
    %651 = vmatpush1.msra.mxu0 0.0
    %652 = vmatprep.subr.mxu0 0.0
    %653 = vmatpush1.msra.mxu0 0.0
    %654 = vmatprep.subr.mxu0 0.0
    %655 = vmatpush1.msra.mxu0 0.0
    %656 = vmatprep.subr.mxu0 0.0
    %657 = vmatpush1.msra.mxu0 0.0
    %658 = vmatprep.subr.mxu0 0.0
    %659 = vmatpush1.msra.mxu0 0.0
    %660 = vmatprep.subr.mxu0 0.0
    %661 = vmatpush1.msra.mxu0 0.0
    %662 = vmatprep.subr.mxu0 0.0
    %663 = vmatpush1.msra.mxu0 0.0
    %664 = vmatprep.subr.mxu0 0.0
    %665 = vmatpush1.msra.mxu0 0.0
    %666 = vmatprep.subr.mxu0 0.0
    %667 = vmatpush1.msra.mxu0 0.0
    %668 = vmatprep.subr.mxu0 0.0
    %669 = vmatpush1.msra.mxu0 %v396
    %670 = vmatprep.subr.mxu0 0.0
    %671 = vmatpush2.msra.mxu0 0.0
    %672 = vmatprep.subr.mxu0 0.0
    %673 = vmatpush2.msra.mxu0 0.0
    %674 = vmatprep.subr.mxu0 0.0
    %675 = vmatpush2.msra.mxu0 0.0
    %676 = vmatprep.subr.mxu0 0.0
    %677 = vmatpush2.msra.mxu0 0.0
    %678 = vmatprep.subr.mxu0 0.0
    %679 = vmatpush2.msra.mxu0 0.0
    %680 = vmatprep.subr.mxu0 0.0
    %681 = vmatpush2.msra.mxu0 0.0
    %682 = vmatprep.subr.mxu0 0.0
    %683 = vmatpush2.msra.mxu0 0.0
    %684 = vmatprep.subr.mxu0 0.0
    %685 = vmatpush2.msra.mxu0 0.0
    %686 = vmatprep.subr.mxu0 0.0
    %687 = vmatpush2.msra.mxu0 0.0
    %688 = vmatprep.subr.mxu0 0.0
    %689 = vmatpush2.msra.mxu0 0.0
    %690 = vmatprep.subr.mxu0 0.0
    %691 = vmatpush2.msra.mxu0 0.0
    %692 = vmatprep.subr.mxu0 0.0
    %693 = vmatpush2.msra.mxu0 0.0
    %694 = vmatprep.subr.mxu0 0.0
    %695 = vmatpush2.msra.mxu0 0.0
    %696 = vmatprep.subr.mxu0 0.0
    %697 = vmatpush2.msra.mxu0 0.0
    %698 = vmatprep.subr.mxu0 0.0
    %699 = vmatpush2.msra.mxu0 0.0
    %700 = vmatprep.subr.mxu0 0.0
    %701 = vmatpush2.msra.mxu0 0.0
    %702 = vmatprep.mubr.f32.mxu0 0.0
    %703 = vmatmul.mubr.f32.gmra.mxu0 %v636
    %v704 = vpop.f32.mrf.mxu0
    %v705 = vadd.f32 0.0, %v704
    %v706 = vpop.f32.mrf.mxu0
    %707 = vdwg.mxu0
    %v708 = vadd.f32 %v289, %v632
    %v709 = vadd.f32 %v294, %v705
    %v710 = vtanh.pop %v708
    %v711 = vtanh.pop %v709
    %v712 = vld [vmem:[#allocation8] sm:$0xff]
    %v713 = vld [vmem:[#allocation8 + $0x8] sm:$0xff]
    %v714 = vld [vmem:[#allocation8 + $0x10] sm:$0xff]
    %v715 = vld [vmem:[#allocation8 + $0x18] sm:$0xff]
    %v716 = vld [vmem:[#allocation8 + $0x20] sm:$0xff]
    %v717 = vld [vmem:[#allocation8 + $0x28] sm:$0xff]
    %v718 = vld [vmem:[#allocation8 + $0x30] sm:$0xff]
    %v719 = vld [vmem:[#allocation8 + $0x38] sm:$0xff]
    %v720 = vld [vmem:[#allocation8 + $0x40] sm:$0xff]
    %v721 = vld [vmem:[#allocation8 + $0x48] sm:$0xff]
    %v722 = vld [vmem:[#allocation8 + $0x50] sm:$0xff]
    %v723 = vld [vmem:[#allocation8 + $0x58] sm:$0xff]
    %v724 = vld [vmem:[#allocation8 + $0x60] sm:$0xff]
    %v725 = vld [vmem:[#allocation8 + $0x68] sm:$0xff]
    %v726 = vld [vmem:[#allocation8 + $0x70] sm:$0xff]
    %v727 = vld [vmem:[#allocation8 + $0x78] sm:$0xff]
    %v728 = vld [vmem:[%s7] sm:$0x1]
    %v730 = vlaneseq
    %v731 = vshrl.u32 %v730, 7
    %v732 = vsub.s32 0, %v731
    %v733 = vrot.slane %v728, %v732
    %735 = vmatprep.subr.mxu0 0.0
    %736 = vmatpush1.msra.mxu0 %v727
    %737 = vmatprep.subr.mxu0 0.0
    %738 = vmatpush1.msra.mxu0 %v726
    %739 = vmatprep.subr.mxu0 0.0
    %740 = vmatpush1.msra.mxu0 %v725
    %741 = vmatprep.subr.mxu0 0.0
    %742 = vmatpush1.msra.mxu0 %v724
    %743 = vmatprep.subr.mxu0 0.0
    %744 = vmatpush1.msra.mxu0 %v723
    %745 = vmatprep.subr.mxu0 0.0
    %746 = vmatpush1.msra.mxu0 %v722
    %747 = vmatprep.subr.mxu0 0.0
    %748 = vmatpush1.msra.mxu0 %v721
    %749 = vmatprep.subr.mxu0 0.0
    %750 = vmatpush1.msra.mxu0 %v720
    %751 = vmatprep.subr.mxu0 0.0
    %752 = vmatpush1.msra.mxu0 %v719
    %753 = vmatprep.subr.mxu0 0.0
    %754 = vmatpush1.msra.mxu0 %v718
    %755 = vmatprep.subr.mxu0 0.0
    %756 = vmatpush1.msra.mxu0 %v717
    %757 = vmatprep.subr.mxu0 0.0
    %758 = vmatpush1.msra.mxu0 %v716
    %759 = vmatprep.subr.mxu0 0.0
    %760 = vmatpush1.msra.mxu0 %v715
    %761 = vmatprep.subr.mxu0 0.0
    %762 = vmatpush1.msra.mxu0 %v714
    %763 = vmatprep.subr.mxu0 0.0
    %764 = vmatpush1.msra.mxu0 %v713
    %765 = vmatprep.subr.mxu0 0.0
    %766 = vmatpush1.msra.mxu0 %v712
    %767 = vmatprep.subr.mxu0 0.0
    %768 = vmatpush2.msra.mxu0 0.0
    %769 = vmatprep.subr.mxu0 0.0
    %770 = vmatpush2.msra.mxu0 0.0
    %771 = vmatprep.subr.mxu0 0.0
    %772 = vmatpush2.msra.mxu0 0.0
    %773 = vmatprep.subr.mxu0 0.0
    %774 = vmatpush2.msra.mxu0 0.0
    %775 = vmatprep.subr.mxu0 0.0
    %776 = vmatpush2.msra.mxu0 0.0
    %777 = vmatprep.subr.mxu0 0.0
    %778 = vmatpush2.msra.mxu0 0.0
    %779 = vmatprep.subr.mxu0 0.0
    %780 = vmatpush2.msra.mxu0 0.0
    %781 = vmatprep.subr.mxu0 0.0
    %782 = vmatpush2.msra.mxu0 0.0
    %783 = vmatprep.subr.mxu0 0.0
    %784 = vmatpush2.msra.mxu0 0.0
    %785 = vmatprep.subr.mxu0 0.0
    %786 = vmatpush2.msra.mxu0 0.0
    %787 = vmatprep.subr.mxu0 0.0
    %788 = vmatpush2.msra.mxu0 0.0
    %789 = vmatprep.subr.mxu0 0.0
    %790 = vmatpush2.msra.mxu0 0.0
    %791 = vmatprep.subr.mxu0 0.0
    %792 = vmatpush2.msra.mxu0 0.0
    %793 = vmatprep.subr.mxu0 0.0
    %794 = vmatpush2.msra.mxu0 0.0
    %795 = vmatprep.subr.mxu0 0.0
    %796 = vmatpush2.msra.mxu0 0.0
    %797 = vmatprep.subr.mxu0 0.0
    %798 = vmatpush2.msra.mxu0 0.0
    %799 = vmatprep.mubr.f32.mxu0 0.0
    %800 = vmatmul.mubr.f32.gmra.mxu0 %v710
    %v801 = vpop.f32.mrf.mxu0
    %v802 = vadd.f32 %v733, %v801
    %v803 = vpop.f32.mrf.mxu0
    %804 = vmatprep.mubr.f32.mxu0 0.0
    %805 = vmatmul.mubr.f32.gmra.mxu0 %v711
    %v806 = vpop.f32.mrf.mxu0
    %v807 = vadd.f32 %v733, %v806
    %v808 = vpop.f32.mrf.mxu0
    %809 = vdwg.mxu0
    %vm810 = vcmp.lt.s32.totalorder %v90, 64
    %v811 = vsel %vm810, %v802, -1e+30
    %v812 = vsel %vm810, %v807, -1e+30
    %813 = vmax.xlane.f32.xlu0 %v811
    %v814 = vpop.xlane.xlu0 %813
    %815 = vmax.xlane.f32.xlu0 %v812
    %v816 = vpop.xlane.xlu0 %815
    %v817 = vsub.f32 %v811, %v814
    %v818 = vsub.f32 %v812, %v816
    %v819 = vmul.f32 %v817, 1.442695
    %v820 = vpow.pop %v819
    %v821 = vmul.f32 %v818, 1.442695
    %v822 = vpow.pop %v821
    %823 = vadd.xlane.f32.xlu0 %v820
    %v824 = vpop.xlane.xlu0 %823
    %825 = vadd.xlane.f32.xlu0 %v822
    %v826 = vpop.xlane.xlu0 %825
    %v827 = vlog2.pop %v824
    %v828 = vmul.f32 %v827, 0.6931472
    %v829 = vlog2.pop %v826
    %v830 = vmul.f32 %v829, 0.6931472
    %v831 = vadd.f32 %v814, %v828
    %v832 = vadd.f32 %v816, %v830
    %v833 = vsel %vm109, %v811, 0.0
    %v834 = vsel %vm110, %v812, 0.0
    %835 = vadd.xlane.f32.xlu0 %v833
    %v836 = vpop.xlane.xlu0 %835
    %837 = vadd.xlane.f32.xlu0 %v834
    %v838 = vpop.xlane.xlu0 %837
    %v839 = vsub.f32 %v831, %v836
    %v840 = vsub.f32 %v832, %v838
    %vm841 = vcmask 7168
    %v842 = vsel %vm841, %v839, 0.0
    %v843 = vsel %vm841, %v840, 0.0
    %v844 = vadd.f32 %v842, %v843
    %845 = vadd.xlane.f32.xlu0 %v844
    %v846 = vpop.xlane.xlu0 %845
    %v847 = vrot.slane %v846, 4
    %v848 = vadd.f32 %v846, %v847
    %v849 = vrot.slane %v848, 2
    %v850 = vadd.f32 %v848, %v849
    %v851 = vrot.slane %v850, 1
    %v852 = vadd.f32 %v850, %v851
    %s853 = vtos %v852
    %v854 = vstv %s853
    %v855 = vmul.f32 %v854, 0.0625
    %vm856 = vcmask 0
    %857 = vst.msk [vmem:[#allocation10] sm:$0x1] %vm856, %v855
    // Predicated region
    $region50: #{tpu_custom_call.1} parent=1 // pred_check
      _
    $region51: #{tpu_custom_call.1} parent=1 // pred_check_branch
      %859 = sbr.rel (0) target = $region53
    $region52: #{tpu_custom_call.1} parent=1 // pred_region
      %s861 = ssub.s32 16, 16
      %862 = vsyncadd [#allocation4], %s861
      %s864 = sshll.u32 [#allocation10], 4
      %s865 = int_to_ptr.vmem [resolvable:$true] %s864
      %867 = dma.vmem_to_hbm [thread:$0]  %s865, 16, %s8, [#allocation4]
    $region53: #{tpu_custom_call.1} parent=1 // pred_fallthru
      _
    // Predicated region
    $region54: #{tpu_custom_call.1} parent=1 // pred_check
      _
    $region55: #{tpu_custom_call.1} parent=1 // pred_check_branch
      %869 = sbr.rel (0) target = $region57
    $region56: #{tpu_custom_call.1} parent=1 // pred_region
      %870 = dma.done [#allocation4], 16
    $region57: #{tpu_custom_call.1} parent=1 // pred_fallthru
      _
    %871 = vsyncpa [#allocation3], 1
    %872 = vsyncpa [#allocation6], 1
    %873 = vsyncpa [#allocation9], 1
    %874 = vsyncpa [#allocation4], 1

</llo_original>
